<compile_context>
chip_gen: v6e
topology: v6e:2x2x1
jax: 0.10.0
libtpu: 0.0.40
codegen_flags: <defaults>
</compile_context>

<pallas_src>
import jax
import jax.numpy as jnp
from jax.experimental import pallas as pl
from jax.experimental.pallas import tpu as pltpu


# ------------------------- generation-aware knobs --------------------------- #
def _gen_params():
    """(block_bytes, vmem_limit_bytes, min_grid_steps) per TPU generation."""
    vmem = 0
    try:
        info = pltpu.get_tpu_info()
        for attr in ("vmem_capacity_bytes", "vmem_size_bytes", "vmem_bytes"):
            v = getattr(info, attr, None)
            if v:
                vmem = int(v)
                break
    except Exception:
        vmem = 0
    if vmem >= (100 << 20):
        # v5e / v6e: 128 MiB VMEM, single TensorCore.  Bigger blocks amortize
        # the ~0.35 us/step grid overhead; scoped default on v5e is only 16 MiB.
        return (8 << 20), (64 << 20), 1
    if vmem > 0:
        # v7x-class part: 64 MiB VMEM, 2 TensorCores -> keep blocks smaller and
        # make sure the grid has >= ~4 pipelined steps per core.
        return (4 << 20), (32 << 20), 8
    # Unknown part: conservative settings legal on every generation.
    return (4 << 20), (32 << 20), 1


def _lane_tile(n, bytes_per_lane, block_bytes):
    """Lane-dim (last axis) tile: multiple of 128 bounded by block_bytes,
    or the full extent when everything fits in one block."""
    if n <= 128:
        # TODO(synk): deep UNet stages with N < 128 should fold B (or C) into
        # the lane axis before calling the kernel to avoid masked vst stores.
        return n
    tn = (block_bytes // max(1, bytes_per_lane)) // 128 * 128
    tn = max(128, tn)
    return n if tn >= n else tn


# ------------------- fused conv1x1 [+ RMSNorm] + skip add ------------------- #
def _make_conv1x1_epilogue_kernel(cin, cout, use_mxu, with_norm):
    def kernel(*refs):
        if with_norm:
            w_ref, b_ref, g_ref, x_ref, s_ref, o_ref = refs
        else:
            w_ref, b_ref, x_ref, s_ref, o_ref = refs

        xt = x_ref[0]                                  # (cin, tn), native dtype
        if use_mxu:
            # Native-dtype operands straight to the MXU; f32 accumulation only.
            y = jnp.dot(w_ref[...], xt, preferred_element_type=jnp.float32)
        else:
            # Tiny contraction: a near-empty MXU pass is waste; VPU FMA chain.
            wf = w_ref[...].astype(jnp.float32)
            xf = xt.astype(jnp.float32)
            y = wf[:, 0:1] * xf[0:1, :]
            for c in range(1, cin):
                y = y + wf[:, c:c + 1] * xf[c:c + 1, :]

        y = y + b_ref[...].astype(jnp.float32)         # (cout, 1) lane-broadcast

        if with_norm:
            # torch: F.normalize(y, dim=1) * g * sqrt(C)
            nrm = jnp.sqrt(jnp.sum(y * y, axis=0, keepdims=True))
            y = y / jnp.maximum(nrm, 1e-12)
            y = y * g_ref[...].astype(jnp.float32) * (cout ** 0.5)

        o_ref[0] = (y + s_ref[0].astype(jnp.float32)).astype(o_ref.dtype)

    return kernel


def _fused_conv1x1_epilogue(x, skip, w, b, g=None):
    """out = [RMSNorm_C(] Conv1d(Cin, Cout, 1)(x) [)] + skip, single HBM pass.

    x:    (B, Cin, N)     skip: (B, Cout, N)
    w:    (Cout, Cin)     b:    (Cout,)       g: (Cout,) or None
    """
    B, Cin, N = x.shape
    Cout = w.shape[0]
    assert w.shape == (Cout, Cin)
    assert skip.shape == (B, Cout, N)
    assert b.shape == (Cout,)
    if g is not None:
        assert g.shape == (Cout,)

    block_bytes, vmem_limit, min_steps = _gen_params()
    itemsize = jnp.dtype(x.dtype).itemsize
    bytes_per_lane = (Cin + 2 * Cout) * itemsize       # x + skip + out columns
    tn = _lane_tile(N, bytes_per_lane, block_bytes)
    # 2-TC parts only: shrink the lane tile until both cores get pipelined work.
    while (min_steps > 1 and B * pl.cdiv(N, tn) < min_steps
           and tn > 128 and tn % 256 == 0):
        tn //= 2
    grid = (B, pl.cdiv(N, tn))

    use_mxu = Cin >= 16
    kernel = _make_conv1x1_epilogue_kernel(Cin, Cout, use_mxu, with_norm=g is not None)

    def const_spec(shape):
        return pl.BlockSpec(shape, lambda i, j: (0, 0))

    x_spec = pl.BlockSpec((1, Cin, tn), lambda i, j: (i, 0, j))
    io_spec = pl.BlockSpec((1, Cout, tn), lambda i, j: (i, 0, j))

    in_specs = [const_spec((Cout, Cin)), const_spec((Cout, 1))]
    operands = [w, b.reshape(Cout, 1)]
    if g is not None:
        in_specs.append(const_spec((Cout, 1)))
        operands.append(g.reshape(Cout, 1))
    in_specs += [x_spec, io_spec]
    operands += [x, skip]

    return pl.pallas_call(
        kernel,
        out_shape=jax.ShapeDtypeStruct((B, Cout, N), x.dtype),
        grid_spec=pltpu.PrefetchScalarGridSpec(
            num_scalar_prefetch=0,
            grid=grid,
            in_specs=in_specs,
            out_specs=io_spec,
        ),
        compiler_params=pltpu.CompilerParams(
            dimension_semantics=("parallel", "parallel"),
            vmem_limit_bytes=vmem_limit,
        ),
    )(*operands)


def conv1x1_skip_add(x, skip, w, b):
    """ResnetBlock tail: `h + res_conv(x)` with res_conv = Conv1d(Cin, Cout, 1)."""
    return _fused_conv1x1_epilogue(x, skip, w, b, g=None)


def conv1x1_rmsnorm_skip_add(x, skip, w, b, g):
    """Residual(PreNorm(LinearAttention)) tail:
    RMSNorm(Conv1d(hidden, dim, 1)(x)) + skip."""
    return _fused_conv1x1_epilogue(x, skip, w, b, g=g)


def residual(fn, x, *args, **kwargs):
    """Generic Residual(fn) for non-fusible fn.  The skip-add is left to XLA's
    elementwise fusion on purpose: a standalone Pallas add would cost an extra
    full HBM round trip (see perf review)."""
    return fn(x, *args, **kwargs) + x


# --------- Residual(PreNorm(LinearAttention)) with fused Pallas tail -------- #
def make_residual_prenorm_linear_attention(dim, key, heads=4, dim_head=32):
    hidden = heads * dim_head
    k1, k2, k3 = jax.random.split(key, 3)
    w_qkv = jax.random.normal(k1, (hidden * 3, dim), jnp.float32) * 0.05
    w_out = jax.random.normal(k2, (dim, hidden), jnp.float32) * 0.05
    b_out = jax.random.normal(k3, (dim,), jnp.float32) * 0.05
    g_pre = jnp.ones((dim,), jnp.float32)       # PreNorm RMSNorm gain
    g_post = jnp.ones((dim,), jnp.float32)      # to_out RMSNorm gain
    scale = dim_head ** -0.5

    def rmsnorm(t, g):   # torch: F.normalize(t, dim=1) * g * sqrt(C)
        nrm = jnp.sqrt(jnp.sum(t * t, axis=1, keepdims=True))
        return t / jnp.maximum(nrm, 1e-12) * g[None, :, None] * (t.shape[1] ** 0.5)

    def attention_body(x):   # everything up to (excluding) to_out conv + norm
        bsz, _, n = x.shape
        h = rmsnorm(x, g_pre)
        qkv = jnp.einsum("oc,bcn->bon", w_qkv, h)
        q, k, v = jnp.split(qkv, 3, axis=1)
        q = q.reshape(bsz, heads, dim_head, n)
        k = k.reshape(bsz, heads, dim_head, n)
        v = v.reshape(bsz, heads, dim_head, n)
        q = jax.nn.softmax(q, axis=-2) * scale
        k = jax.nn.softmax(k, axis=-1)
        ctx = jnp.einsum("bhdn,bhen->bhde", k, v)
        out = jnp.einsum("bhde,bhdn->bhen", ctx, q)
        return out.reshape(bsz, hidden, n)

    def fused(x):
        out = attention_body(x)
        # Pallas: to_out 1x1 conv + bias + RMSNorm + residual add, one pass.
        return conv1x1_rmsnorm_skip_add(out, x, w_out, b_out, g_post)

    def reference(x):
        out = attention_body(x)
        y = jnp.einsum("oc,bcn->bon", w_out, out,
                       precision=jax.lax.Precision.HIGHEST) + b_out[None, :, None]
        return rmsnorm(y, g_post) + x

    return fused, reference


# ----------------------------------- demo ----------------------------------- #
if __name__ == "__main__":
    key = jax.random.PRNGKey(0)
    kx, kh, kw, kb, ka = jax.random.split(key, 5)

    # (batch, channels, seq) as seen by Unet1D's Conv1d blocks.
    B, C, N = 2, 4, 256
    x = jax.random.normal(kx, (B, C, N), jnp.float32)

    # 1) ResnetBlock tail: out = h + Conv1d(C, C_out, 1)(x), fused in Pallas.
    C_out = 8
    h = jax.random.normal(kh, (B, C_out, N), jnp.float32)
    w = jax.random.normal(kw, (C_out, C), jnp.float32) * 0.1
    b = jax.random.normal(kb, (C_out,), jnp.float32) * 0.1
    out1 = jax.block_until_ready(conv1x1_skip_add(x, h, w, b))
    ref1 = (jnp.einsum("oc,bcn->bon", w, x, precision=jax.lax.Precision.HIGHEST)
            + b[None, :, None] + h)
    assert out1.shape == (B, C_out, N)
    assert jnp.allclose(out1, ref1, atol=2e-3, rtol=2e-3), "conv1x1+skip mismatch"

    # 2) Residual(PreNorm(LinearAttention)): attention body in plain JAX, the
    #    to_out 1x1 conv + RMSNorm + skip-add fused in one Pallas kernel.
    fused_attn, ref_attn = make_residual_prenorm_linear_attention(C, ka)
    out2 = jax.block_until_ready(fused_attn(x))
    ref2 = ref_attn(x)
    assert out2.shape == x.shape
    assert jnp.allclose(out2, ref2, atol=2e-2, rtol=2e-2), "attn residual mismatch"

    print("KERNEL_OK")
</pallas_src>

<mosaic_0001>
module attributes {stable_mosaic.version = 11 : i64} {
  func.func @kernel(%arg0: i32, %arg1: i32, %arg2: memref<8x4xf32, #tpu.memory_space<vmem>>, %arg3: memref<8x1xf32, #tpu.memory_space<vmem>>, %arg4: memref<1x4x256xf32, #tpu.memory_space<vmem>>, %arg5: memref<1x8x256xf32, #tpu.memory_space<vmem>>, %arg6: memref<1x8x256xf32, #tpu.memory_space<vmem>>) attributes {dimension_semantics = [#tpu.dimension_semantics<parallel>, #tpu.dimension_semantics<parallel>], iteration_bounds = array<i64: 2, 1>, scalar_prefetch = 0 : i64, scratch_operands = 0 : i64, tpu.core_type = #tpu.core_type<tc>, window_params = [{pipeline_mode = #tpu.pipeline_mode<synchronous>, transform_indices = @transform_0, window_bounds = array<i64: 8, 4>}, {pipeline_mode = #tpu.pipeline_mode<synchronous>, transform_indices = @transform_1, window_bounds = array<i64: 8, 1>}, {transform_indices = @transform_2, window_bounds = array<i64: 1, 4, 256>}, {transform_indices = @transform_3, window_bounds = array<i64: 1, 8, 256>}, {transform_indices = @transform_4, window_bounds = array<i64: 1, 8, 256>}]} {
    %c0 = arith.constant 0 : index
    %c0_0 = arith.constant 0 : index
    %c0_1 = arith.constant 0 : index
    %0 = vector.load %arg4[%c0, %c0_0, %c0_1] : memref<1x4x256xf32, #tpu.memory_space<vmem>>, vector<1x4x256xf32>
    %1 = vector.shape_cast %0 : vector<1x4x256xf32> to vector<4x256xf32>
    %c0_2 = arith.constant 0 : index
    %c0_3 = arith.constant 0 : index
    %2 = vector.load %arg2[%c0_2, %c0_3] : memref<8x4xf32, #tpu.memory_space<vmem>>, vector<8x4xf32>
    %3 = vector.extract_strided_slice %2 {offsets = [0, 0], sizes = [8, 1], strides = [1, 1]} : vector<8x4xf32> to vector<8x1xf32>
    %4 = vector.extract_strided_slice %1 {offsets = [0, 0], sizes = [1, 256], strides = [1, 1]} : vector<4x256xf32> to vector<1x256xf32>
    %5 = vector.broadcast %3 : vector<8x1xf32> to vector<8x256xf32>
    %6 = vector.broadcast %4 : vector<1x256xf32> to vector<8x256xf32>
    %7 = arith.mulf %5, %6 : vector<8x256xf32>
    %8 = vector.extract_strided_slice %2 {offsets = [0, 1], sizes = [8, 1], strides = [1, 1]} : vector<8x4xf32> to vector<8x1xf32>
    %9 = vector.extract_strided_slice %1 {offsets = [1, 0], sizes = [1, 256], strides = [1, 1]} : vector<4x256xf32> to vector<1x256xf32>
    %10 = vector.broadcast %8 : vector<8x1xf32> to vector<8x256xf32>
    %11 = vector.broadcast %9 : vector<1x256xf32> to vector<8x256xf32>
    %12 = arith.mulf %10, %11 : vector<8x256xf32>
    %13 = arith.addf %7, %12 : vector<8x256xf32>
    %14 = vector.extract_strided_slice %2 {offsets = [0, 2], sizes = [8, 1], strides = [1, 1]} : vector<8x4xf32> to vector<8x1xf32>
    %15 = vector.extract_strided_slice %1 {offsets = [2, 0], sizes = [1, 256], strides = [1, 1]} : vector<4x256xf32> to vector<1x256xf32>
    %16 = vector.broadcast %14 : vector<8x1xf32> to vector<8x256xf32>
    %17 = vector.broadcast %15 : vector<1x256xf32> to vector<8x256xf32>
    %18 = arith.mulf %16, %17 : vector<8x256xf32>
    %19 = arith.addf %13, %18 : vector<8x256xf32>
    %20 = vector.extract_strided_slice %2 {offsets = [0, 3], sizes = [8, 1], strides = [1, 1]} : vector<8x4xf32> to vector<8x1xf32>
    %21 = vector.extract_strided_slice %1 {offsets = [3, 0], sizes = [1, 256], strides = [1, 1]} : vector<4x256xf32> to vector<1x256xf32>
    %22 = vector.broadcast %20 : vector<8x1xf32> to vector<8x256xf32>
    %23 = vector.broadcast %21 : vector<1x256xf32> to vector<8x256xf32>
    %24 = arith.mulf %22, %23 : vector<8x256xf32>
    %25 = arith.addf %19, %24 : vector<8x256xf32>
    %c0_4 = arith.constant 0 : index
    %c0_5 = arith.constant 0 : index
    %26 = vector.load %arg3[%c0_4, %c0_5] : memref<8x1xf32, #tpu.memory_space<vmem>>, vector<8x1xf32>
    %27 = vector.broadcast %26 : vector<8x1xf32> to vector<8x256xf32>
    %28 = arith.addf %25, %27 : vector<8x256xf32>
    %c0_6 = arith.constant 0 : index
    %c0_7 = arith.constant 0 : index
    %c0_8 = arith.constant 0 : index
    %29 = vector.load %arg5[%c0_6, %c0_7, %c0_8] : memref<1x8x256xf32, #tpu.memory_space<vmem>>, vector<1x8x256xf32>
    %30 = vector.shape_cast %29 : vector<1x8x256xf32> to vector<8x256xf32>
    %31 = arith.addf %28, %30 : vector<8x256xf32>
    %c0_9 = arith.constant 0 : index
    %c0_10 = arith.constant 0 : index
    %c0_11 = arith.constant 0 : index
    %32 = vector.load %arg6[%c0_9, %c0_10, %c0_11] : memref<1x8x256xf32, #tpu.memory_space<vmem>>, vector<1x8x256xf32>
    %33 = vector.shape_cast %32 : vector<1x8x256xf32> to vector<8x256xf32>
    %34 = vector.shape_cast %31 : vector<8x256xf32> to vector<1x8x256xf32>
    tpu.vector_store %arg6[%c0_9, %c0_10, %c0_11], %34 {strides = array<i32>} : memref<1x8x256xf32, #tpu.memory_space<vmem>>, vector<1x8x256xf32>,
    return
  }
  func.func @transform_0(%arg0: i32, %arg1: i32) -> (i32, i32) {
    %c0_i32 = arith.constant 0 : i32
    %c0_i32_0 = arith.constant 0 : i32
    %c0_i32_1 = arith.constant 0 : i32
    return %c0_i32, %c0_i32_0 : i32, i32
  }
  func.func @transform_1(%arg0: i32, %arg1: i32) -> (i32, i32) {
    %c0_i32 = arith.constant 0 : i32
    %c0_i32_0 = arith.constant 0 : i32
    %c0_i32_1 = arith.constant 0 : i32
    return %c0_i32, %c0_i32_0 : i32, i32
  }
  func.func @transform_2(%arg0: i32, %arg1: i32) -> (i32, i32, i32) {
    %c0_i32 = arith.constant 0 : i32
    %c0_i32_0 = arith.constant 0 : i32
    return %arg0, %c0_i32, %arg1 : i32, i32, i32
  }
  func.func @transform_3(%arg0: i32, %arg1: i32) -> (i32, i32, i32) {
    %c0_i32 = arith.constant 0 : i32
    %c0_i32_0 = arith.constant 0 : i32
    return %arg0, %c0_i32, %arg1 : i32, i32, i32
  }
  func.func @transform_4(%arg0: i32, %arg1: i32) -> (i32, i32, i32) {
    %c0_i32 = arith.constant 0 : i32
    %c0_i32_0 = arith.constant 0 : i32
    return %arg0, %c0_i32, %arg1 : i32, i32, i32
  }
}

</mosaic_0001>

<llo_original>
// kernel: tpu_custom_call.1
$region0: #{tpu_custom_call.1}
  #allocation0 [shape = 'u32[]', space=smem, size = 0x4, offset = 0x4, fixed_abs, tag = 'smem constant byte address 0x4 - core index']
  #allocation1 [shape = 'u32[144,128]{1,0:T(1,128)}', space=vmem, size = 0x12000, scoped, tag = 'internal scratch']
  %s0 = inlined_call_operand.vmem [shape: f32[8,4], index: 0, kind: input, shape index: {}]
  %s1 = inlined_call_operand.vmem [shape: f32[8,1], index: 1, kind: input, shape index: {}]
  %s2 = inlined_call_operand.vmem [shape: f32[2,4,256], index: 2, kind: input, shape index: {}]
  %s3 = inlined_call_operand.hbm [shape: f32[2,8,256], index: 3, kind: input, shape index: {}]
  %s4 = inlined_call_operand.hbm [shape: f32[2,8,256], index: 4, kind: output, shape index: {}]
  %s5 = sld [smem:[#allocation0]]
  $region53: #{tpu_custom_call.1} parent=0
    _
  %s7 = ssub.s32 1, %s5
  %s8 = scalar_select 0, %s7, %s5
  $region1: #{tpu_custom_call.1} parent=0
    #allocation2 [shape = 'u8[16384]{0}', space=vmem, size = 0x4000, scoped, tag = 'input window, operand 3']
    #allocation3 [shape = 's32[2]{0}', space=sflag, size = 0x8, scoped, tag = 'scoped memory for tpu_custom_call.1']
    #allocation4 [shape = 's32[2]{0}', space=sflag, size = 0x8, scoped, tag = 'scoped memory for tpu_custom_call.1']
    #allocation5 [shape = 'u8[16384]{0}', space=vmem, size = 0x4000, scoped, tag = 'output window, operand 0']
    %9 = vsyncpa [#allocation3], 0
    %s10 = scalar_lea.sflag [#allocation3], 1
    %11 = vsyncpa %s10, 0
    %12 = vsyncpa [#allocation4], 0
    %s13 = scalar_lea.sflag [#allocation4], 1
    %14 = vsyncpa %s13, 0
    loop: start=0, step=1, limit=4
    $region2: #{tpu_custom_call.1} parent=1 // loop_pre_header
      _
    $region3: #{tpu_custom_call.1} parent=1 // loop_header
      %s16 = sphi 0, %s20
      %p17 = scmp.ge.s32.totalorder %s16, 4
      %s23 = sphi 0, %s35
      %s24 = sphi 0, %s31
      %s25 = sphi 0, %s23
      %s26 = sphi 0, %s24
      %s27 = sphi 0, %s25
      %s28 = sphi 0, %s26
      %s36 = sphi 0, %s36
      %s38 = sphi 0, %s36
      %s39 = sphi 0, %s38
      %s53 = sphi 0, %s39
      %s57 = sphi 0, %s57
      %s59 = sphi 0, %s57
      %s60 = sphi 0, %s59
      %s74 = sphi 0, %s60
      %s82 = sphi 0, %s84
      %s85 = sphi 0, %s82
      %s86 = sphi 0, %s85
      %s102 = sphi 0, %s86
      %s110 = sphi 0, %s112
      %s113 = sphi 0, %s110
      %s114 = sphi 0, %s113
      %s130 = sphi 0, %s114
      %s138 = sphi 0, %s140
      %s141 = sphi 0, %s138
      %s142 = sphi 0, %s141
      %s158 = sphi 0, %s142
    $region4: #{tpu_custom_call.1} parent=1 // loop_header_branch
      %19 = sbr.rel (%p17) target = $region8
    $region5: #{tpu_custom_call.1} parent=1 // loop_body
      %s21 = ssub.s32 %s16, 1
      %s22 = ssub.s32 %s16, 2
      %s29 = sadd.s32 1, %s24
      %p30 = scmp.ge.s32.totalorder %s29, 1
      %s31 = scalar_select %p30, 0, %s29
      %s32 = sadd.s32 1, %s23
      %s33 = scalar_select %p30, %s32, %s23
      %p34 = scmp.ge.s32.totalorder %s33, 2
      %s35 = scalar_select %p34, 0, %s33
      %s37 = sadd.s32 %s36, 1
      %p40 = scmp.eq.s32.totalorder %s16, 1
      %p41 = scmp.ne.s32.totalorder %s36, %s38
      %p42 = scmp.eq.s32.totalorder %s16, 0
      %p43 = por %p41, %p42
      %p44 = scmp.ne.s32.totalorder %s36, %s38
      %p45 = scmp.eq.s32.totalorder %s21, 1
      %p46 = por %p44, %p45
      %p47 = scmp.ne.s32.totalorder %s38, %s39
      %p48 = scmp.eq.s32.totalorder %s21, 0
      %p49 = por %p47, %p48
      %p50 = scmp.ne.s32.totalorder %s38, %s39
      %p51 = scmp.eq.s32.totalorder %s22, 1
      %p52 = por %p50, %p51
      %p54 = scmp.ne.s32.totalorder %s39, %s53
      %p55 = scmp.eq.s32.totalorder %s22, 0
      %p56 = por %p54, %p55
      %s58 = sadd.s32 %s57, 1
      %p61 = scmp.eq.s32.totalorder %s16, 1
      %p62 = scmp.ne.s32.totalorder %s57, %s59
      %p63 = scmp.eq.s32.totalorder %s16, 0
      %p64 = por %p62, %p63
      %p65 = scmp.ne.s32.totalorder %s57, %s59
      %p66 = scmp.eq.s32.totalorder %s21, 1
      %p67 = por %p65, %p66
      %p68 = scmp.ne.s32.totalorder %s59, %s60
      %p69 = scmp.eq.s32.totalorder %s21, 0
      %p70 = por %p68, %p69
      %p71 = scmp.ne.s32.totalorder %s59, %s60
      %p72 = scmp.eq.s32.totalorder %s22, 1
      %p73 = por %p71, %p72
      %p75 = scmp.ne.s32.totalorder %s60, %s74
      %p76 = scmp.eq.s32.totalorder %s22, 0
      %p77 = por %p75, %p76
      %s78 = ssub.s32 %s23, %s35
      %s79 = ssub.s32 %s24, %s31
      %s80 = sor.u32 %s78, %s79
      %p81 = scmp.eq.s32.totalorder %s80, 0
      %s83 = sadd.s32 %s82, 1
      %s84 = scalar_select %p81, %s82, %s83
      %p87 = pneg %p81
      %p88 = scmp.eq.s32.totalorder %s16, 1
      %p89 = por %p87, %p88
      %p90 = scmp.ne.s32.totalorder %s82, %s85
      %p91 = scmp.eq.s32.totalorder %s16, 0
      %p92 = por %p90, %p91
      %p93 = scmp.ne.s32.totalorder %s82, %s85
      %p94 = scmp.eq.s32.totalorder %s21, 1
      %p95 = por %p93, %p94
      %p96 = scmp.ne.s32.totalorder %s85, %s86
      %p97 = scmp.eq.s32.totalorder %s21, 0
      %p98 = por %p96, %p97
      %p99 = scmp.ne.s32.totalorder %s85, %s86
      %p100 = scmp.eq.s32.totalorder %s22, 1
      %p101 = por %p99, %p100
      %p103 = scmp.ne.s32.totalorder %s86, %s102
      %p104 = scmp.eq.s32.totalorder %s22, 0
      %p105 = por %p103, %p104
      %s106 = ssub.s32 %s23, %s35
      %s107 = ssub.s32 %s24, %s31
      %s108 = sor.u32 %s106, %s107
      %p109 = scmp.eq.s32.totalorder %s108, 0
      %s111 = sadd.s32 %s110, 1
      %s112 = scalar_select %p109, %s110, %s111
      %p115 = pneg %p109
      %p116 = scmp.eq.s32.totalorder %s16, 1
      %p117 = por %p115, %p116
      %p118 = scmp.ne.s32.totalorder %s110, %s113
      %p119 = scmp.eq.s32.totalorder %s16, 0
      %p120 = por %p118, %p119
      %p121 = scmp.ne.s32.totalorder %s110, %s113
      %p122 = scmp.eq.s32.totalorder %s21, 1
      %p123 = por %p121, %p122
      %p124 = scmp.ne.s32.totalorder %s113, %s114
      %p125 = scmp.eq.s32.totalorder %s21, 0
      %p126 = por %p124, %p125
      %p127 = scmp.ne.s32.totalorder %s113, %s114
      %p128 = scmp.eq.s32.totalorder %s22, 1
      %p129 = por %p127, %p128
      %p131 = scmp.ne.s32.totalorder %s114, %s130
      %p132 = scmp.eq.s32.totalorder %s22, 0
      %p133 = por %p131, %p132
      %s134 = ssub.s32 %s23, %s35
      %s135 = ssub.s32 %s24, %s31
      %s136 = sor.u32 %s134, %s135
      %p137 = scmp.eq.s32.totalorder %s136, 0
      %s139 = sadd.s32 %s138, 1
      %s140 = scalar_select %p137, %s138, %s139
      %p143 = pneg %p137
      %p144 = scmp.eq.s32.totalorder %s16, 1
      %p145 = por %p143, %p144
      %p146 = scmp.ne.s32.totalorder %s138, %s141
      %p147 = scmp.eq.s32.totalorder %s16, 0
      %p148 = por %p146, %p147
      %p149 = scmp.ne.s32.totalorder %s138, %s141
      %p150 = scmp.eq.s32.totalorder %s21, 1
      %p151 = por %p149, %p150
      %p152 = scmp.ne.s32.totalorder %s141, %s142
      %p153 = scmp.eq.s32.totalorder %s21, 0
      %p154 = por %p152, %p153
      %p155 = scmp.ne.s32.totalorder %s141, %s142
      %p156 = scmp.eq.s32.totalorder %s22, 1
      %p157 = por %p155, %p156
      %p159 = scmp.ne.s32.totalorder %s142, %s158
      %p160 = scmp.eq.s32.totalorder %s22, 0
      %p161 = por %p159, %p160
      %p162 = scmp.le.s32.totalorder 1, %s16
      %p163 = scmp.lt.s32.totalorder %s16, 3
      %p164 = pnand %p162, %p163
      %p165 = pneg %p164
      // Predicated region
      $region9: #{tpu_custom_call.1} parent=5 // pred_check
        _
      $region10: #{tpu_custom_call.1} parent=5 // pred_check_branch
        %167 = sbr.rel (%p164) target = $region12
      $region11: #{tpu_custom_call.1} parent=5 // pred_region
        %s168 = ssub.s32 %s16, 1
        // Predicated region
        $region13: #{tpu_custom_call.1} parent=11 // pred_check
          %p169 = pneg %p49
        $region14: #{tpu_custom_call.1} parent=11 // pred_check_branch
          %171 = sbr.rel (%p169) target = $region16
        $region15: #{tpu_custom_call.1} parent=11 // pred_region
          _
        $region16: #{tpu_custom_call.1} parent=11 // pred_fallthru
          _
        // Predicated region
        $region17: #{tpu_custom_call.1} parent=11 // pred_check
          %p172 = pneg %p70
        $region18: #{tpu_custom_call.1} parent=11 // pred_check_branch
          %174 = sbr.rel (%p172) target = $region20
        $region19: #{tpu_custom_call.1} parent=11 // pred_region
          _
        $region20: #{tpu_custom_call.1} parent=11 // pred_fallthru
          _
      $region12: #{tpu_custom_call.1} parent=5 // pred_fallthru
        _
      %p175 = scmp.lt.s32.totalorder %s16, 2
      // Predicated region
      $region21: #{tpu_custom_call.1} parent=5 // pred_check
        %p176 = pneg %p175
      $region22: #{tpu_custom_call.1} parent=5 // pred_check_branch
        %178 = sbr.rel (%p176) target = $region24
      $region23: #{tpu_custom_call.1} parent=5 // pred_region
        // Predicated region
        $region25: #{tpu_custom_call.1} parent=23 // pred_check
          %p179 = pneg %p92
        $region26: #{tpu_custom_call.1} parent=23 // pred_check_branch
          %181 = sbr.rel (%p179) target = $region28
        $region27: #{tpu_custom_call.1} parent=23 // pred_region
          %s182 = smul.u32 2, %s24
          %p183 = scmp.lt.s32.totalorder %s23, 1
          %s184 = scalar_select %p183, %s23, 1
          %p185 = scmp.lt.s32.totalorder %s182, 1
          %s186 = scalar_select %p185, %s182, 1
          %s187 = smul.addr %s184, 2
          %s188 = sadd.s32 %s186, %s187
          %s189 = smul.addr %s188, 4
          %s190 = scalar_lea.vmem %s2, %s189
          %s191 = smul.u32 2, %s24
        $region28: #{tpu_custom_call.1} parent=23 // pred_fallthru
          _
        // Predicated region
        $region29: #{tpu_custom_call.1} parent=23 // pred_check
          %p192 = pneg %p120
        $region30: #{tpu_custom_call.1} parent=23 // pred_check_branch
          %194 = sbr.rel (%p192) target = $region32
        $region31: #{tpu_custom_call.1} parent=23 // pred_region
          %s195 = sand.u32 %s110, 1
          %s196 = scalar_lea.sflag [#allocation3], %s195
          %s197 = sand.u32 %s110, 1
          %s198 = smul.addr %s197, 16
          %s199 = scalar_lea.vmem [#allocation2], %s198
          %s200 = smul.u32 2, %s24
          %s202 = ssub.s32 256, 256
          %203 = vsyncadd %s196, %s202
          %s204 = smul.addr %s23, 2
          %s205 = sadd.s32 %s200, %s204
          %s206 = smul.addr %s205, 128
          %s207 = scalar_lea.hbm %s3, %s206
          %s209 = sshll.u32 %s199, 4
          %s210 = int_to_ptr.vmem [resolvable:$true] %s209
          %212 = dma.hbm_to_vmem [thread:$0]  %s207, 256, %s210, %s196
        $region32: #{tpu_custom_call.1} parent=23 // pred_fallthru
          _
      $region24: #{tpu_custom_call.1} parent=5 // pred_fallthru
        _
      %p213 = scmp.le.s32.totalorder 1, %s16
      %p214 = scmp.lt.s32.totalorder %s16, 3
      %p215 = pnand %p213, %p214
      %p216 = pneg %p215
      // Predicated region
      $region33: #{tpu_custom_call.1} parent=5 // pred_check
        _
      $region34: #{tpu_custom_call.1} parent=5 // pred_check_branch
        %218 = sbr.rel (%p215) target = $region36
      $region35: #{tpu_custom_call.1} parent=5 // pred_region
        %s219 = ssub.s32 %s16, 1
        %s220 = sand.u32 %s113, 1
        %s221 = scalar_lea.sflag [#allocation3], %s220
        %s222 = sand.u32 %s113, 1
        %s223 = smul.addr %s222, 16
        %s224 = scalar_lea.vmem [#allocation2], %s223
        // Predicated region
        $region37: #{tpu_custom_call.1} parent=35 // pred_check
          %p225 = pneg %p126
        $region38: #{tpu_custom_call.1} parent=35 // pred_check_branch
          %227 = sbr.rel (%p225) target = $region40
        $region39: #{tpu_custom_call.1} parent=35 // pred_region
          %228 = dma.done %s221, 256
        $region40: #{tpu_custom_call.1} parent=35 // pred_fallthru
          _
        %p229 = pneg %p49
        %p230 = pneg %p46
        %p231 = pneg %p70
        %p232 = pneg %p67
        %s233 = smul.u32 2, %s26
        %p234 = scmp.lt.s32.totalorder %s25, 1
        %s235 = scalar_select %p234, %s25, 1
        %p236 = scmp.lt.s32.totalorder %s233, 1
        %s237 = scalar_select %p236, %s233, 1
        %s238 = smul.addr %s235, 2
        %s239 = sadd.s32 %s237, %s238
        %s240 = smul.addr %s239, 4
        %s241 = scalar_lea.vmem %s2, %s240
        %p242 = pneg %p98
        %p243 = pneg %p95
        %s244 = sand.u32 %s113, 1
        %s245 = scalar_lea.sflag [#allocation3], %s244
        %s246 = sand.u32 %s113, 1
        %s247 = smul.addr %s246, 16
        %s248 = scalar_lea.vmem [#allocation2], %s247
        %p249 = pneg %p126
        %p250 = pneg %p123
        %p251 = pneg %p154
        %p252 = pneg %p151
        %s253 = sand.u32 %s141, 1
        %s254 = scalar_lea.sflag [#allocation4], %s253
        %s255 = sand.u32 %s141, 1
        %s256 = smul.addr %s255, 16
        %s257 = scalar_lea.vmem [#allocation5], %s256
        %s258 = smul.u32 2, %s26
        %p259 = scmp.lt.s32.totalorder %s25, 1
        %s260 = scalar_select %p259, %s25, 1
        %p261 = scmp.lt.s32.totalorder %s258, 1
        %s262 = scalar_select %p261, %s258, 1
        %s263 = smul.addr %s260, 2
        %s264 = sadd.s32 %s262, %s263
        %s265 = smul.addr %s264, 4
        %s266 = scalar_lea.vmem %s2, %s265
        %s267 = smul.u32 2, %s26
        %s268 = smul.u32 2, %s26
        %s269 = smul.u32 2, %s26
        %v270 = vld [vmem:[%s266] sm:$0xff]
        %v271 = vld [vmem:[%s0] sm:$0xff]
        %273 = vset.pattern.permute.xlu0 0
        %274 = vperm.xlu0 %273, %v271
        %v275 = vpop.permute.xlu0 %274
        %v278 = vlaneseq
        %v279 = vshrl.u32 %v278, 7
        %v280 = vsub.s32 0, %v279
        %v281 = vrot.slane %v270, %v280
        %v282 = vlaneseq
        %v283 = vshrl.u32 %v282, 7
        %v284 = vsub.s32 4, %v283
        %v285 = vrot.slane %v270, %v284
        %v288 = vlaneseq
        %v289 = vshrl.u32 %v288, 7
        %v290 = vsub.s32 0, %v289
        %v291 = vrot.slane %v281, %v290
        %v292 = vlaneseq
        %v293 = vshrl.u32 %v292, 7
        %v294 = vsub.s32 0, %v293
        %v295 = vrot.slane %v285, %v294
        %v296 = vmul.f32 %v275, %v291
        %v297 = vmul.f32 %v275, %v295
        %298 = vset.pattern.permute.xlu0 1
        %299 = vperm.xlu0 %298, %v271
        %v300 = vpop.permute.xlu0 %299
        %v302 = vlaneseq
        %v303 = vshrl.u32 %v302, 7
        %v304 = vsub.s32 1, %v303
        %v305 = vrot.slane %v270, %v304
        %v306 = vlaneseq
        %v307 = vshrl.u32 %v306, 7
        %v308 = vsub.s32 5, %v307
        %v309 = vrot.slane %v270, %v308
        %v312 = vlaneseq
        %v313 = vshrl.u32 %v312, 7
        %v314 = vsub.s32 1, %v313
        %v315 = vrot.slane %v305, %v314
        %v316 = vlaneseq
        %v317 = vshrl.u32 %v316, 7
        %v318 = vsub.s32 1, %v317
        %v319 = vrot.slane %v309, %v318
        %v320 = vmul.f32 %v300, %v315
        %v321 = vmul.f32 %v300, %v319
        %v322 = vadd.f32 %v296, %v320
        %v323 = vadd.f32 %v297, %v321
        %324 = vset.pattern.permute.xlu0 2
        %325 = vperm.xlu0 %324, %v271
        %v326 = vpop.permute.xlu0 %325
        %v328 = vlaneseq
        %v329 = vshrl.u32 %v328, 7
        %v330 = vsub.s32 2, %v329
        %v331 = vrot.slane %v270, %v330
        %v332 = vlaneseq
        %v333 = vshrl.u32 %v332, 7
        %v334 = vsub.s32 6, %v333
        %v335 = vrot.slane %v270, %v334
        %v338 = vlaneseq
        %v339 = vshrl.u32 %v338, 7
        %v340 = vsub.s32 2, %v339
        %v341 = vrot.slane %v331, %v340
        %v342 = vlaneseq
        %v343 = vshrl.u32 %v342, 7
        %v344 = vsub.s32 2, %v343
        %v345 = vrot.slane %v335, %v344
        %v346 = vmul.f32 %v326, %v341
        %v347 = vmul.f32 %v326, %v345
        %v348 = vadd.f32 %v322, %v346
        %v349 = vadd.f32 %v323, %v347
        %350 = vset.pattern.permute.xlu0 3
        %351 = vperm.xlu0 %350, %v271
        %v352 = vpop.permute.xlu0 %351
        %v354 = vlaneseq
        %v355 = vshrl.u32 %v354, 7
        %v356 = vsub.s32 3, %v355
        %v357 = vrot.slane %v270, %v356
        %v358 = vlaneseq
        %v359 = vshrl.u32 %v358, 7
        %v360 = vsub.s32 7, %v359
        %v361 = vrot.slane %v270, %v360
        %v364 = vlaneseq
        %v365 = vshrl.u32 %v364, 7
        %v366 = vsub.s32 3, %v365
        %v367 = vrot.slane %v357, %v366
        %v368 = vlaneseq
        %v369 = vshrl.u32 %v368, 7
        %v370 = vsub.s32 3, %v369
        %v371 = vrot.slane %v361, %v370
        %v372 = vmul.f32 %v352, %v367
        %v373 = vmul.f32 %v352, %v371
        %v374 = vadd.f32 %v348, %v372
        %v375 = vadd.f32 %v349, %v373
        %v376 = vld [vmem:[%s1] sm:$0xff]
        %378 = vset.pattern.permute.xlu0 0
        %379 = vperm.xlu0 %378, %v376
        %v380 = vpop.permute.xlu0 %379
        %v382 = vadd.f32 %v374, %v380
        %v383 = vadd.f32 %v375, %v380
        %v384 = vld [vmem:[%s224] sm:$0xff]
        %v385 = vld [vmem:[%s224 + $0x8] sm:$0xff]
        %v386 = vadd.f32 %v382, %v384
        %v387 = vadd.f32 %v383, %v385
        %388 = vst [vmem:[%s257] sm:$0xff] %v386
        %389 = vst [vmem:[%s257 + $0x8] sm:$0xff] %v387
        %s390 = sand.u32 %s141, 1
        %s391 = scalar_lea.sflag [#allocation4], %s390
        %s392 = sand.u32 %s141, 1
        %s393 = smul.addr %s392, 16
        %s394 = scalar_lea.vmem [#allocation5], %s393
        // Predicated region
        $region41: #{tpu_custom_call.1} parent=35 // pred_check
          %p395 = pneg %p151
        $region42: #{tpu_custom_call.1} parent=35 // pred_check_branch
          %397 = sbr.rel (%p395) target = $region44
        $region43: #{tpu_custom_call.1} parent=35 // pred_region
          %s398 = smul.u32 2, %s26
          %s400 = ssub.s32 256, 256
          %401 = vsyncadd %s391, %s400
          %s402 = smul.addr %s25, 2
          %s403 = sadd.s32 %s398, %s402
          %s404 = smul.addr %s403, 128
          %s405 = scalar_lea.hbm %s4, %s404
          %s407 = sshll.u32 %s394, 4
          %s408 = int_to_ptr.vmem [resolvable:$true] %s407
          %410 = dma.vmem_to_hbm [thread:$0]  %s408, 256, %s405, %s391
        $region44: #{tpu_custom_call.1} parent=35 // pred_fallthru
          _
      $region36: #{tpu_custom_call.1} parent=5 // pred_fallthru
        _
      %p411 = scmp.le.s32.totalorder 2, %s16
      // Predicated region
      $region45: #{tpu_custom_call.1} parent=5 // pred_check
        %p412 = pneg %p411
      $region46: #{tpu_custom_call.1} parent=5 // pred_check_branch
        %414 = sbr.rel (%p412) target = $region48
      $region47: #{tpu_custom_call.1} parent=5 // pred_region
        %s415 = ssub.s32 %s16, 2
        // Predicated region
        $region49: #{tpu_custom_call.1} parent=47 // pred_check
          %p416 = pneg %p157
        $region50: #{tpu_custom_call.1} parent=47 // pred_check_branch
          %418 = sbr.rel (%p416) target = $region52
        $region51: #{tpu_custom_call.1} parent=47 // pred_region
          %s419 = sand.u32 %s142, 1
          %s420 = scalar_lea.sflag [#allocation4], %s419
          %s421 = sand.u32 %s142, 1
          %s422 = smul.addr %s421, 16
          %s423 = scalar_lea.vmem [#allocation5], %s422
          %424 = dma.done %s420, 256
        $region52: #{tpu_custom_call.1} parent=47 // pred_fallthru
          _
      $region48: #{tpu_custom_call.1} parent=5 // pred_fallthru
        _
    $region6: #{tpu_custom_call.1} parent=1 // loop_footer
      %s20 = sadd.s32 1, %s16
    $region7: #{tpu_custom_call.1} parent=1 // loop_footer_branch
      %15 = sbr.rel target = $region3
    $region8: #{tpu_custom_call.1} parent=1 // loop_exit
      _
    %425 = vsyncpa [#allocation3], 1
    %s426 = scalar_lea.sflag [#allocation3], 1
    %427 = vsyncpa %s426, 1
    %428 = vsyncpa [#allocation4], 1
    %s429 = scalar_lea.sflag [#allocation4], 1
    %430 = vsyncpa %s429, 1

</llo_original>
